<compile_context>
chip_gen: v5e
topology: v5e:2x2
jax: 0.10.0
libtpu: 0.0.40
codegen_flags: <defaults>
</compile_context>

<pallas_src>
import jax
import jax.numpy as jnp
from jax.experimental import pallas as pl
from jax.experimental.pallas import tpu as pltpu

HIDDEN = 64
NUM_FEATS = 3                     # MLPModel3 uses data[:, 0], data[:, 1], data[:, 2]
CONCAT = NUM_FEATS * HIDDEN       # 192
OUT_LANES = 128                   # pad output_dim up to a lane-dense slab
MAX_TILE_B = 1024                 # batch tile; sized for v7x 64 MiB VMEM w/ headroom


def _round_up(x, m):
    return ((x + m - 1) // m) * m


def mlp3_kernel(data_ref, wexp_ref, bexp_ref, w1_ref, b1_ref, w2_ref, b2_ref,
                out_ref):
    # Streamed batch tile, cast once to bf16 for the MXU.
    x = data_ref[...].astype(jnp.bfloat16)                      # [TB, D_in]

    # 3x (Linear(1,64)+ReLU) + concat fused into a single block-structured
    # matmul on the MXU; rows >= 3 of W_expand are zero, so only the first
    # three data columns participate (matches the torch forward).
    x_all = jnp.dot(x, wexp_ref[...],
                    preferred_element_type=jnp.float32) + bexp_ref[...]
    x_all = jnp.maximum(x_all, 0.0)                             # [TB, 192] f32

    # fc1: Linear(192, 64) + ReLU  (single 192-wide contraction, not 3x64)
    h = jnp.dot(x_all.astype(jnp.bfloat16), w1_ref[...],
                preferred_element_type=jnp.float32) + b1_ref[...]
    h = jnp.maximum(h, 0.0)                                     # [TB, 64] f32

    # fc2: Linear(64, output_dim) padded to 128 lanes, no activation.
    out_ref[...] = jnp.dot(h.astype(jnp.bfloat16), w2_ref[...],
                           preferred_element_type=jnp.float32) + b2_ref[...]


def mlp3_forward(data, params, *, tile_b=MAX_TILE_B):
    """data: [B, input_dim] float32 (only columns 0..2 are used, as in torch)."""
    B, input_dim = data.shape
    output_dim = params["w2"].shape[1]

    # ---- wrapper-side parameter prep (tiny, one-time) ----------------------
    wexp = jnp.zeros((input_dim, CONCAT), jnp.float32)
    for j in range(NUM_FEATS):
        wexp = wexp.at[j, j * HIDDEN:(j + 1) * HIDDEN].set(params["wfeat"][j])
    bexp = params["bfeat"].reshape(1, CONCAT)

    out_pad = _round_up(max(output_dim, 1), OUT_LANES)
    w2p = jnp.zeros((HIDDEN, out_pad), jnp.float32).at[:, :output_dim].set(
        params["w2"])
    b2p = jnp.zeros((1, out_pad), jnp.float32).at[:, :output_dim].set(
        params["b2"].reshape(1, output_dim))

    # bf16 weights (halve VMEM/HBM traffic, ~2x MXU rate); biases stay f32.
    wexp = wexp.astype(jnp.bfloat16)
    w1 = params["w1"].astype(jnp.bfloat16)
    w2p = w2p.astype(jnp.bfloat16)

    # ---- batch tiling ------------------------------------------------------
    TB = tile_b if B >= tile_b else _round_up(B, 8)   # sublane multiple of 8
    B_pad = _round_up(B, TB)
    if B_pad != B:
        data = jnp.pad(data, ((0, B_pad - B), (0, 0)))
    grid = (B_pad // TB,)

    const = lambda i: (0, 0)   # weight/bias blocks stay resident
    out = pl.pallas_call(
        mlp3_kernel,
        out_shape=jax.ShapeDtypeStruct((B_pad, out_pad), jnp.float32),
        grid=grid,
        in_specs=[
            pl.BlockSpec((TB, input_dim), lambda i: (i, 0)),    # data (streamed)
            pl.BlockSpec((input_dim, CONCAT), const),           # W_expand
            pl.BlockSpec((1, CONCAT), const),                   # b_expand
            pl.BlockSpec((CONCAT, HIDDEN), const),              # w1
            pl.BlockSpec((1, HIDDEN), const),                   # b1
            pl.BlockSpec((HIDDEN, out_pad), const),             # w2 (padded)
            pl.BlockSpec((1, out_pad), const),                  # b2 (padded)
        ],
        out_specs=pl.BlockSpec((TB, out_pad), lambda i: (i, 0)),
        compiler_params=pltpu.CompilerParams(
            dimension_semantics=("parallel",),                  # 2 TCs on v7x
            vmem_limit_bytes=32 * 1024 * 1024),
    )(data, wexp, bexp, w1, params["b1"], w2p, b2p)

    return out[:B, :output_dim]


def init_params(key, output_dim):
    """Deterministic synthetic init (uniform, roughly PyTorch-style ranges).

    Linear weights are stored transposed vs. torch.nn.Linear: [in, out]."""
    ks = jax.random.split(key, 6)

    def unif(k, shape, fan_in):
        bound = 1.0 / jnp.sqrt(float(fan_in))
        return jax.random.uniform(k, shape, jnp.float32, -bound, bound)

    # fc_E1 / fc_F1 / fc_G1: three Linear(1,64); stack (1,64) weights -> [3,64]
    wfeat = unif(ks[0], (NUM_FEATS, HIDDEN), 1)
    bfeat = unif(ks[1], (NUM_FEATS, HIDDEN), 1)
    # fc1: Linear(192, 64), stored transposed [192, 64]
    w1 = unif(ks[2], (CONCAT, HIDDEN), CONCAT)
    b1 = unif(ks[3], (1, HIDDEN), CONCAT)
    # fc2: Linear(64, output_dim), stored transposed [64, output_dim]
    w2 = unif(ks[4], (HIDDEN, output_dim), HIDDEN)
    b2 = unif(ks[5], (1, output_dim), HIDDEN)
    return dict(wfeat=wfeat, bfeat=bfeat, w1=w1, b1=b1, w2=w2, b2=b2)


def mlp3_reference(data, params):
    """Pure-JAX (f32) reference of the PyTorch forward pass."""
    chunks = []
    for j in range(NUM_FEATS):
        col = data[:, j:j + 1]                                   # [B, 1]
        chunks.append(jnp.maximum(col * params["wfeat"][j:j + 1, :]
                                  + params["bfeat"][j:j + 1, :], 0.0))
    x_all = jnp.concatenate(chunks, axis=1)                      # [B, 192]
    h = jnp.maximum(x_all @ params["w1"] + params["b1"], 0.0)    # [B, 64]
    return h @ params["w2"] + params["b2"]                       # [B, out]


if __name__ == "__main__":
    key = jax.random.PRNGKey(0)
    k_data, k_param = jax.random.split(key)

    B = 8
    input_dim = NUM_FEATS       # MLPModel3's forward only reads columns 0..2
    output_dim = 4
    data = jax.random.normal(k_data, (B, input_dim), dtype=jnp.float32)
    params = init_params(k_param, output_dim)

    out = mlp3_forward(data, params)
    out = jax.block_until_ready(out)

    ref = mlp3_reference(data, params)
    assert out.shape == (B, output_dim)
    # Loosened tolerance: kernel matmuls use bf16 operands (f32 accumulation).
    assert jnp.allclose(out, ref, atol=5e-2, rtol=5e-2), (
        f"max abs diff = {jnp.max(jnp.abs(out - ref))}")

    print("KERNEL_OK")
</pallas_src>

<mosaic_0001>
module attributes {stable_mosaic.version = 11 : i64} {
  func.func @mlp3_kernel(%arg0: i32, %arg1: memref<8x3xf32, #tpu.memory_space<vmem>>, %arg2: memref<3x192xbf16, #tpu.memory_space<vmem>>, %arg3: memref<1x192xf32, #tpu.memory_space<vmem>>, %arg4: memref<192x64xbf16, #tpu.memory_space<vmem>>, %arg5: memref<1x64xf32, #tpu.memory_space<vmem>>, %arg6: memref<64x128xbf16, #tpu.memory_space<vmem>>, %arg7: memref<1x128xf32, #tpu.memory_space<vmem>>, %arg8: memref<8x128xf32, #tpu.memory_space<vmem>>) attributes {dimension_semantics = [#tpu.dimension_semantics<parallel>], iteration_bounds = array<i64: 1>, scalar_prefetch = 0 : i64, scratch_operands = 0 : i64, tpu.core_type = #tpu.core_type<tc>, window_params = [{transform_indices = @transform_0, window_bounds = array<i64: 8, 3>}, {pipeline_mode = #tpu.pipeline_mode<synchronous>, transform_indices = @transform_1, window_bounds = array<i64: 3, 192>}, {pipeline_mode = #tpu.pipeline_mode<synchronous>, transform_indices = @transform_2, window_bounds = array<i64: 1, 192>}, {pipeline_mode = #tpu.pipeline_mode<synchronous>, transform_indices = @transform_3, window_bounds = array<i64: 192, 64>}, {pipeline_mode = #tpu.pipeline_mode<synchronous>, transform_indices = @transform_4, window_bounds = array<i64: 1, 64>}, {pipeline_mode = #tpu.pipeline_mode<synchronous>, transform_indices = @transform_5, window_bounds = array<i64: 64, 128>}, {pipeline_mode = #tpu.pipeline_mode<synchronous>, transform_indices = @transform_6, window_bounds = array<i64: 1, 128>}, {transform_indices = @transform_7, window_bounds = array<i64: 8, 128>}]} {
    %c0 = arith.constant 0 : index
    %c0_0 = arith.constant 0 : index
    %0 = vector.load %arg1[%c0, %c0_0] : memref<8x3xf32, #tpu.memory_space<vmem>>, vector<8x3xf32>
    %1 = arith.truncf %0 : vector<8x3xf32> to vector<8x3xbf16>
    %c0_1 = arith.constant 0 : index
    %c0_2 = arith.constant 0 : index
    %2 = vector.load %arg2[%c0_1, %c0_2] : memref<3x192xbf16, #tpu.memory_space<vmem>>, vector<3x192xbf16>
    %cst = arith.constant dense<0.000000e+00> : vector<8x192xf32>
    %3 = tpu.matmul %1, %2, %cst {dimension_numbers = #tpu.dot_dimension_numbers<[1], [0], [0], [1], [0, 0, 1, 1], [], []>} : vector<8x3xbf16>, vector<3x192xbf16>, vector<8x192xf32> -> vector<8x192xf32>
    %c0_3 = arith.constant 0 : index
    %c0_4 = arith.constant 0 : index
    %4 = vector.load %arg3[%c0_3, %c0_4] : memref<1x192xf32, #tpu.memory_space<vmem>>, vector<1x192xf32>
    %5 = vector.broadcast %4 : vector<1x192xf32> to vector<8x192xf32>
    %6 = arith.addf %3, %5 : vector<8x192xf32>
    %cst_5 = arith.constant 0.000000e+00 : f32
    %7 = vector.broadcast %cst_5 : f32 to vector<8x192xf32>
    %8 = arith.maximumf %6, %7 : vector<8x192xf32>
    %9 = arith.truncf %8 : vector<8x192xf32> to vector<8x192xbf16>
    %c0_6 = arith.constant 0 : index
    %c0_7 = arith.constant 0 : index
    %10 = vector.load %arg4[%c0_6, %c0_7] : memref<192x64xbf16, #tpu.memory_space<vmem>>, vector<192x64xbf16>
    %cst_8 = arith.constant dense<0.000000e+00> : vector<8x64xf32>
    %11 = tpu.matmul %9, %10, %cst_8 {dimension_numbers = #tpu.dot_dimension_numbers<[1], [0], [0], [1], [0, 0, 1, 1], [], []>} : vector<8x192xbf16>, vector<192x64xbf16>, vector<8x64xf32> -> vector<8x64xf32>
    %c0_9 = arith.constant 0 : index
    %c0_10 = arith.constant 0 : index
    %12 = vector.load %arg5[%c0_9, %c0_10] : memref<1x64xf32, #tpu.memory_space<vmem>>, vector<1x64xf32>
    %13 = vector.broadcast %12 : vector<1x64xf32> to vector<8x64xf32>
    %14 = arith.addf %11, %13 : vector<8x64xf32>
    %cst_11 = arith.constant 0.000000e+00 : f32
    %15 = vector.broadcast %cst_11 : f32 to vector<8x64xf32>
    %16 = arith.maximumf %14, %15 : vector<8x64xf32>
    %17 = arith.truncf %16 : vector<8x64xf32> to vector<8x64xbf16>
    %c0_12 = arith.constant 0 : index
    %c0_13 = arith.constant 0 : index
    %18 = vector.load %arg6[%c0_12, %c0_13] : memref<64x128xbf16, #tpu.memory_space<vmem>>, vector<64x128xbf16>
    %cst_14 = arith.constant dense<0.000000e+00> : vector<8x128xf32>
    %19 = tpu.matmul %17, %18, %cst_14 {dimension_numbers = #tpu.dot_dimension_numbers<[1], [0], [0], [1], [0, 0, 1, 1], [], []>} : vector<8x64xbf16>, vector<64x128xbf16>, vector<8x128xf32> -> vector<8x128xf32>
    %c0_15 = arith.constant 0 : index
    %c0_16 = arith.constant 0 : index
    %20 = vector.load %arg7[%c0_15, %c0_16] : memref<1x128xf32, #tpu.memory_space<vmem>>, vector<1x128xf32>
    %21 = vector.broadcast %20 : vector<1x128xf32> to vector<8x128xf32>
    %22 = arith.addf %19, %21 : vector<8x128xf32>
    %c0_17 = arith.constant 0 : index
    %c0_18 = arith.constant 0 : index
    %23 = vector.load %arg8[%c0_17, %c0_18] : memref<8x128xf32, #tpu.memory_space<vmem>>, vector<8x128xf32>
    tpu.vector_store %arg8[%c0_17, %c0_18], %22 {strides = array<i32>} : memref<8x128xf32, #tpu.memory_space<vmem>>, vector<8x128xf32>,
    return
  }
  func.func @transform_0(%arg0: i32) -> (i32, i32) {
    %c0_i32 = arith.constant 0 : i32
    %c0_i32_0 = arith.constant 0 : i32
    return %arg0, %c0_i32 : i32, i32
  }
  func.func @transform_1(%arg0: i32) -> (i32, i32) {
    %c0_i32 = arith.constant 0 : i32
    %c0_i32_0 = arith.constant 0 : i32
    %c0_i32_1 = arith.constant 0 : i32
    return %c0_i32, %c0_i32_0 : i32, i32
  }
  func.func @transform_2(%arg0: i32) -> (i32, i32) {
    %c0_i32 = arith.constant 0 : i32
    %c0_i32_0 = arith.constant 0 : i32
    %c0_i32_1 = arith.constant 0 : i32
    return %c0_i32, %c0_i32_0 : i32, i32
  }
  func.func @transform_3(%arg0: i32) -> (i32, i32) {
    %c0_i32 = arith.constant 0 : i32
    %c0_i32_0 = arith.constant 0 : i32
    %c0_i32_1 = arith.constant 0 : i32
    return %c0_i32, %c0_i32_0 : i32, i32
  }
  func.func @transform_4(%arg0: i32) -> (i32, i32) {
    %c0_i32 = arith.constant 0 : i32
    %c0_i32_0 = arith.constant 0 : i32
    %c0_i32_1 = arith.constant 0 : i32
    return %c0_i32, %c0_i32_0 : i32, i32
  }
  func.func @transform_5(%arg0: i32) -> (i32, i32) {
    %c0_i32 = arith.constant 0 : i32
    %c0_i32_0 = arith.constant 0 : i32
    %c0_i32_1 = arith.constant 0 : i32
    return %c0_i32, %c0_i32_0 : i32, i32
  }
  func.func @transform_6(%arg0: i32) -> (i32, i32) {
    %c0_i32 = arith.constant 0 : i32
    %c0_i32_0 = arith.constant 0 : i32
    %c0_i32_1 = arith.constant 0 : i32
    return %c0_i32, %c0_i32_0 : i32, i32
  }
  func.func @transform_7(%arg0: i32) -> (i32, i32) {
    %c0_i32 = arith.constant 0 : i32
    %c0_i32_0 = arith.constant 0 : i32
    return %arg0, %c0_i32 : i32, i32
  }
}

</mosaic_0001>

<llo_original>
// kernel: tpu_custom_call.1
$region0: #{tpu_custom_call.1}
  #allocation0 [shape = 'u32[]', space=smem, size = 0x4, offset = 0x4, fixed_abs, tag = 'smem constant byte address 0x4 - core index']
  #allocation1 [shape = 'u32[72,128]{1,0:T(1,128)}', space=vmem, size = 0x9000, scoped, tag = 'internal scratch']
  %s0 = inlined_call_operand.vmem [shape: f32[8,3], index: 0, kind: input, shape index: {}]
  %s1 = inlined_call_operand.vmem [shape: bf16[3,192], index: 1, kind: input, shape index: {}]
  %s2 = inlined_call_operand.vmem [shape: f32[1,192], index: 2, kind: input, shape index: {}]
  %s3 = inlined_call_operand.vmem [shape: bf16[192,64], index: 3, kind: input, shape index: {}]
  %s4 = inlined_call_operand.vmem [shape: f32[1,64], index: 4, kind: input, shape index: {}]
  %s5 = inlined_call_operand.vmem [shape: bf16[64,128], index: 5, kind: input, shape index: {}]
  %s6 = inlined_call_operand.vmem [shape: f32[1,128], index: 6, kind: input, shape index: {}]
  %s7 = inlined_call_operand.hbm [shape: f32[8,128], index: 7, kind: output, shape index: {}]
  %s8 = sld [smem:[#allocation0]]
  $region38: #{tpu_custom_call.1} parent=0
    _
  %s10 = ssub.s32 1, %s8
  %s11 = scalar_select 0, %s10, %s8
  $region1: #{tpu_custom_call.1} parent=0
    #allocation2 [shape = 'u8[4096]{0}', space=vmem, size = 0x1000, scoped, tag = 'output window, operand 0, single buffered']
    #allocation3 [shape = 's32[1]{0}', space=sflag, size = 0x4, scoped, tag = 'scoped memory for tpu_custom_call.1']
    %12 = vsyncpa [#allocation3], 0
    // Predicated region
    $region2: #{tpu_custom_call.1} parent=1 // pred_check
      _
    $region3: #{tpu_custom_call.1} parent=1 // pred_check_branch
      %14 = sbr.rel (0) target = $region5
    $region4: #{tpu_custom_call.1} parent=1 // pred_region
      _
    $region5: #{tpu_custom_call.1} parent=1 // pred_fallthru
      _
    // Predicated region
    $region6: #{tpu_custom_call.1} parent=1 // pred_check
      _
    $region7: #{tpu_custom_call.1} parent=1 // pred_check_branch
      %16 = sbr.rel (0) target = $region9
    $region8: #{tpu_custom_call.1} parent=1 // pred_region
      _
    $region9: #{tpu_custom_call.1} parent=1 // pred_fallthru
      _
    // Predicated region
    $region10: #{tpu_custom_call.1} parent=1 // pred_check
      _
    $region11: #{tpu_custom_call.1} parent=1 // pred_check_branch
      %18 = sbr.rel (0) target = $region13
    $region12: #{tpu_custom_call.1} parent=1 // pred_region
      _
    $region13: #{tpu_custom_call.1} parent=1 // pred_fallthru
      _
    // Predicated region
    $region14: #{tpu_custom_call.1} parent=1 // pred_check
      _
    $region15: #{tpu_custom_call.1} parent=1 // pred_check_branch
      %20 = sbr.rel (0) target = $region17
    $region16: #{tpu_custom_call.1} parent=1 // pred_region
      _
    $region17: #{tpu_custom_call.1} parent=1 // pred_fallthru
      _
    // Predicated region
    $region18: #{tpu_custom_call.1} parent=1 // pred_check
      _
    $region19: #{tpu_custom_call.1} parent=1 // pred_check_branch
      %22 = sbr.rel (0) target = $region21
    $region20: #{tpu_custom_call.1} parent=1 // pred_region
      _
    $region21: #{tpu_custom_call.1} parent=1 // pred_fallthru
      _
    // Predicated region
    $region22: #{tpu_custom_call.1} parent=1 // pred_check
      _
    $region23: #{tpu_custom_call.1} parent=1 // pred_check_branch
      %24 = sbr.rel (0) target = $region25
    $region24: #{tpu_custom_call.1} parent=1 // pred_region
      _
    $region25: #{tpu_custom_call.1} parent=1 // pred_fallthru
      _
    // Predicated region
    $region26: #{tpu_custom_call.1} parent=1 // pred_check
      _
    $region27: #{tpu_custom_call.1} parent=1 // pred_check_branch
      %26 = sbr.rel (0) target = $region29
    $region28: #{tpu_custom_call.1} parent=1 // pred_region
      _
    $region29: #{tpu_custom_call.1} parent=1 // pred_fallthru
      _
    %v28 = vld [vmem:[%s0] sm:$0xff]
    %v29 = vpack.c.bf16 %v28, %v28
    %v30 = vld [vmem:[%s1] sm:$0xf]
    %v31 = vld [vmem:[%s2] sm:$0x3]
    %v33 = vperm.slane %v31, 0
    %v34 = vperm.slane %v31, 1
    %38 = vst [vmem:[#allocation1] ss:$4 sm:$0xff] %v30
    %v39 = vld.sshfl [vmem:[#allocation1] sm:$0xff pattern:$0x73625140]
    %v40 = vld.sshfl [vmem:[#allocation1 + $0x8] sm:$0xff pattern:$0x73625140]
    %vm41 = vcmask 23552
    %v43 = vsel %vm41, %v29, 0
    %vm45 = vcmask 1040384
    %vm46 = vcmask 1041408
    %v47 = vsel %vm45, 4294967295, 65535
    %v48 = vsel %vm46, %v47, 0
    %v49 = vand.u32 %v39, %v48
    %v51 = vand.u32 %v40, %v48
    %53 = vmatpush.bf16.msra.mxu0 0
    %54 = vmatpush.bf16.msra.mxu0 0
    %55 = vmatpush.bf16.msra.mxu0 0
    %56 = vmatpush.bf16.msra.mxu0 0
    %57 = vmatpush.bf16.msra.mxu0 0
    %58 = vmatpush.bf16.msra.mxu0 0
    %59 = vmatpush.bf16.msra.mxu0 0
    %60 = vmatpush.bf16.msra.mxu0 %v49
    %61 = vmatmul.bf16.gmra.mxu0 %v43
    %v62 = vpop.f32.mrf.mxu0
    %v63 = vadd.f32 %v33, %v62
    %v64 = vpop.f32.mrf.mxu0
    %65 = vdwg.mxu0
    %66 = vmatpush.bf16.msra.mxu0 0
    %67 = vmatpush.bf16.msra.mxu0 0
    %68 = vmatpush.bf16.msra.mxu0 0
    %69 = vmatpush.bf16.msra.mxu0 0
    %70 = vmatpush.bf16.msra.mxu0 0
    %71 = vmatpush.bf16.msra.mxu0 0
    %72 = vmatpush.bf16.msra.mxu0 0
    %73 = vmatpush.bf16.msra.mxu0 %v51
    %74 = vmatmul.bf16.gmra.mxu0 %v43
    %v75 = vpop.f32.mrf.mxu0
    %v76 = vadd.f32 %v34, %v75
    %v77 = vpop.f32.mrf.mxu0
    %78 = vdwg.mxu0
    %v79 = vmax.f32 %v63, 0.0
    %v80 = vmax.f32 %v76, 0.0
    %v81 = vpack.c.bf16 %v79, %v79
    %v82 = vpack.c.bf16 %v80, %v80
    %v83 = vld [vmem:[%s3] sm:$0xf]
    %v84 = vld [vmem:[%s3 + $0x4] sm:$0xf]
    %v85 = vld [vmem:[%s3 + $0x8] sm:$0xf]
    %v86 = vld [vmem:[%s3 + $0xc] sm:$0xf]
    %v87 = vld [vmem:[%s3 + $0x10] sm:$0xf]
    %v88 = vld [vmem:[%s3 + $0x14] sm:$0xf]
    %v89 = vld [vmem:[%s3 + $0x18] sm:$0xf]
    %v90 = vld [vmem:[%s3 + $0x1c] sm:$0xf]
    %v91 = vld [vmem:[%s3 + $0x20] sm:$0xf]
    %v92 = vld [vmem:[%s3 + $0x24] sm:$0xf]
    %v93 = vld [vmem:[%s3 + $0x28] sm:$0xf]
    %v94 = vld [vmem:[%s3 + $0x2c] sm:$0xf]
    %v95 = vld [vmem:[%s3 + $0x30] sm:$0xf]
    %v96 = vld [vmem:[%s3 + $0x34] sm:$0xf]
    %v97 = vld [vmem:[%s3 + $0x38] sm:$0xf]
    %v98 = vld [vmem:[%s3 + $0x3c] sm:$0xf]
    %v99 = vld [vmem:[%s3 + $0x40] sm:$0xf]
    %v100 = vld [vmem:[%s3 + $0x44] sm:$0xf]
    %v101 = vld [vmem:[%s3 + $0x48] sm:$0xf]
    %v102 = vld [vmem:[%s3 + $0x4c] sm:$0xf]
    %v103 = vld [vmem:[%s3 + $0x50] sm:$0xf]
    %v104 = vld [vmem:[%s3 + $0x54] sm:$0xf]
    %v105 = vld [vmem:[%s3 + $0x58] sm:$0xf]
    %v106 = vld [vmem:[%s3 + $0x5c] sm:$0xf]
    %v107 = vld [vmem:[%s4] sm:$0x1]
    %v109 = vperm.slane %v107, 0
    %v135 = vunpack.c.l.b16 %v83
    %v136 = vunpack.c.l.b16 %v84
    %v137 = vunpack.c.l.b16 %v85
    %v138 = vunpack.c.l.b16 %v86
    %v139 = vunpack.c.l.b16 %v87
    %v140 = vunpack.c.l.b16 %v88
    %v141 = vunpack.c.l.b16 %v89
    %v142 = vunpack.c.l.b16 %v90
    %v143 = vunpack.c.l.b16 %v91
    %v144 = vunpack.c.l.b16 %v92
    %v145 = vunpack.c.l.b16 %v93
    %v146 = vunpack.c.l.b16 %v94
    %v147 = vunpack.c.l.b16 %v95
    %v148 = vunpack.c.l.b16 %v96
    %v149 = vunpack.c.l.b16 %v97
    %v150 = vunpack.c.l.b16 %v98
    %v151 = vunpack.c.l.b16 %v99
    %v152 = vunpack.c.l.b16 %v100
    %v153 = vunpack.c.l.b16 %v101
    %v154 = vunpack.c.l.b16 %v102
    %v155 = vunpack.c.l.b16 %v103
    %v156 = vunpack.c.l.b16 %v104
    %v157 = vunpack.c.l.b16 %v105
    %v158 = vunpack.c.l.b16 %v106
    %v159 = vpack.c.b16 %v136, %v135
    %v160 = vpack.c.b16 %v138, %v137
    %v161 = vpack.c.b16 %v140, %v139
    %v162 = vpack.c.b16 %v142, %v141
    %v163 = vpack.c.b16 %v144, %v143
    %v164 = vpack.c.b16 %v146, %v145
    %v165 = vpack.c.b16 %v148, %v147
    %v166 = vpack.c.b16 %v150, %v149
    %v167 = vpack.c.b16 %v152, %v151
    %v168 = vpack.c.b16 %v154, %v153
    %v169 = vpack.c.b16 %v156, %v155
    %v170 = vpack.c.b16 %v158, %v157
    %vm183 = vcmask 523264
    %v185 = vsel %vm183, %v82, 0
    %187 = vmatpush.bf16.msra.mxu0 %v166
    %188 = vmatpush.bf16.msra.mxu0 %v165
    %189 = vmatpush.bf16.msra.mxu0 %v164
    %190 = vmatpush.bf16.msra.mxu0 %v163
    %191 = vmatpush.bf16.msra.mxu0 %v162
    %192 = vmatpush.bf16.msra.mxu0 %v161
    %193 = vmatpush.bf16.msra.mxu0 %v160
    %194 = vmatpush.bf16.msra.mxu0 %v159
    %195 = vmatmul.bf16.gmra.mxu0 %v81
    %v196 = vpop.f32.mrf.mxu0
    %v197 = vadd.f32 %v109, %v196
    %v198 = vpop.f32.mrf.mxu0
    %199 = vdwg.mxu0
    %200 = vmatpush.bf16.msra.mxu0 0
    %201 = vmatpush.bf16.msra.mxu0 0
    %202 = vmatpush.bf16.msra.mxu0 0
    %203 = vmatpush.bf16.msra.mxu0 0
    %204 = vmatpush.bf16.msra.mxu0 %v170
    %205 = vmatpush.bf16.msra.mxu0 %v169
    %206 = vmatpush.bf16.msra.mxu0 %v168
    %207 = vmatpush.bf16.msra.mxu0 %v167
    %208 = vmatmul.bf16.gmra.mxu0 %v185
    %v209 = vpop.f32.mrf.mxu0
    %v210 = vadd.f32 %v197, %v209
    %v211 = vpop.f32.mrf.mxu0
    %212 = vdwg.mxu0
    %v213 = vmax.f32 %v210, 0.0
    %v214 = vpack.c.bf16 %v213, %v213
    %v215 = vld [vmem:[%s5] sm:$0xf]
    %v216 = vld [vmem:[%s5 + $0x4] sm:$0xf]
    %v217 = vld [vmem:[%s5 + $0x8] sm:$0xf]
    %v218 = vld [vmem:[%s5 + $0xc] sm:$0xf]
    %v219 = vld [vmem:[%s5 + $0x10] sm:$0xf]
    %v220 = vld [vmem:[%s5 + $0x14] sm:$0xf]
    %v221 = vld [vmem:[%s5 + $0x18] sm:$0xf]
    %v222 = vld [vmem:[%s5 + $0x1c] sm:$0xf]
    %v223 = vld [vmem:[%s6] sm:$0x1]
    %v225 = vperm.slane %v223, 0
    %v235 = vunpack.c.l.b16 %v215
    %v236 = vunpack.c.l.b16 %v216
    %v237 = vunpack.c.l.b16 %v217
    %v238 = vunpack.c.l.b16 %v218
    %v239 = vunpack.c.l.b16 %v219
    %v240 = vunpack.c.l.b16 %v220
    %v241 = vunpack.c.l.b16 %v221
    %v242 = vunpack.c.l.b16 %v222
    %v243 = vpack.c.b16 %v236, %v235
    %v244 = vpack.c.b16 %v238, %v237
    %v245 = vpack.c.b16 %v240, %v239
    %v246 = vpack.c.b16 %v242, %v241
    %v252 = vsel %vm183, %v214, 0
    %254 = vmatpush.bf16.msra.mxu0 0
    %255 = vmatpush.bf16.msra.mxu0 0
    %256 = vmatpush.bf16.msra.mxu0 0
    %257 = vmatpush.bf16.msra.mxu0 0
    %258 = vmatpush.bf16.msra.mxu0 %v246
    %259 = vmatpush.bf16.msra.mxu0 %v245
    %260 = vmatpush.bf16.msra.mxu0 %v244
    %261 = vmatpush.bf16.msra.mxu0 %v243
    %262 = vmatmul.bf16.gmra.mxu0 %v252
    %v263 = vpop.f32.mrf.mxu0
    %v264 = vadd.f32 %v225, %v263
    %v265 = vpop.f32.mrf.mxu0
    %266 = vdwg.mxu0
    %267 = vst [vmem:[#allocation2] sm:$0xff] %v264
    // Predicated region
    $region30: #{tpu_custom_call.1} parent=1 // pred_check
      _
    $region31: #{tpu_custom_call.1} parent=1 // pred_check_branch
      %269 = sbr.rel (0) target = $region33
    $region32: #{tpu_custom_call.1} parent=1 // pred_region
      %271 = vsyncadd [#allocation3], 0
      %s273 = sshll.u32 [#allocation2], 4
      %s274 = int_to_ptr.vmem [resolvable:$true] %s273
      %s275 = sshll.u32 %s7, 4
      %s276 = int_to_ptr.hbm [resolvable:$true] %s275
      %278 = dma.vmem_to_hbm [thread:$0]  %s274, 128, %s276, [#allocation3]
    $region33: #{tpu_custom_call.1} parent=1 // pred_fallthru
      _
    // Predicated region
    $region34: #{tpu_custom_call.1} parent=1 // pred_check
      _
    $region35: #{tpu_custom_call.1} parent=1 // pred_check_branch
      %280 = sbr.rel (0) target = $region37
    $region36: #{tpu_custom_call.1} parent=1 // pred_region
      %282 = dma.done [#allocation3], 128
    $region37: #{tpu_custom_call.1} parent=1 // pred_fallthru
      _
    %283 = vsyncpa [#allocation3], 1

</llo_original>
